<compile_context>
chip_gen: v7x
topology: tpu7x:2x2x1
jax: 0.10.0
libtpu: 0.0.40
codegen_flags: <defaults>
</compile_context>

<pallas_src>
import functools

import jax
import jax.numpy as jnp
from jax import lax
from jax.experimental import pallas as pl
from jax.experimental.pallas import tpu as pltpu


def conv_block_kernel(x_ref, w_ref, b_ref, o_ref, xcat_ref, patch_ref,
                      *, H, W, KH, KW, C_in, C_out, B):
    # x_ref:     (B, C_in, H*W)        B images, channels on sublanes, H*W on lanes
    # w_ref:     (C_out, KH*KW*C_in)   f32, BN scale folded in
    # b_ref:     (C_out, 1)            f32 folded bias (conv bias + BN shift)
    # o_ref:     (B, C_out, H*W)
    # xcat_ref:  (C_in, B*H*W)         VMEM scratch (images merged on the lane axis)
    # patch_ref: (KH*KW*C_in, B*H*W)   VMEM scratch (im2col slab)
    HW = H * W
    BHW = B * HW

    # Merge the B images onto the lane axis: xcat[c, b*HW + p] = x[b, c, p].
    # (B lane-aligned stores; for B == 1 no copy is needed.)
    if B == 1:
        xcat = x_ref[0]
    else:
        for b in range(B):
            xcat_ref[:, b * HW:(b + 1) * HW] = x_ref[b]
        xcat = xcat_ref[...]                            # (C_in, B*HW) f32

    # Per-column row/col index inside each image, generated in-kernel.
    # Float floor-divide decode avoids vector integer div/mod; it is exact for
    # indices far below 2^22 (BHW here is a few thousand at most).
    colf = lax.broadcasted_iota(jnp.int32, (1, BHW), 1).astype(jnp.float32)
    rowg = jnp.floor((colf + 0.5) * (1.0 / W))          # global row = b*H + r
    rr = rowg - jnp.floor((rowg + 0.5) * (1.0 / H)) * H  # row within image
    cc = colf - rowg * W                                 # col within image

    t = 0
    for kh in range(KH):                                 # static 3x3 unroll
        dh = kh - KH // 2
        for kw in range(KW):
            dw = kw - KW // 2
            off = dh * W + dw
            # shifted[c, g] == xcat[c, (g + off) mod BHW]; the wrap-around only
            # ever lands on positions the validity mask zeroes.
            if off == 0:
                shifted = xcat
            else:
                shifted = pltpu.roll(xcat, shift=(-off) % BHW, axis=1)
            if dh == 0 and dw == 0:
                tap = shifted                            # center tap: always valid
            else:
                valid = ((rr + dh >= 0) & (rr + dh < H) &
                         (cc + dw >= 0) & (cc + dw < W))
                tap = jnp.where(valid, shifted, 0.0)     # mask fused into the write
            patch_ref[t * C_in:(t + 1) * C_in, :] = tap
            t += 1

    # Single MXU matmul: (C_out, K) x (K, B*HW), f32 accumulate.
    acc = jnp.dot(w_ref[...], patch_ref[...],
                  preferred_element_type=jnp.float32)    # (C_out, B*HW)
    y = jnp.maximum(acc + b_ref[...], 0.0)               # folded BN bias + ReLU

    # Lane-dense output stores, one (C_out, HW) slab per image.
    for b in range(B):
        o_ref[b] = y[:, b * HW:(b + 1) * HW].astype(o_ref.dtype)


def conv_block_forward(x_nchw, w_oihw, b_conv, gamma, beta,
                       running_mean, running_var, eps=1e-5,
                       images_per_step=None):
    """relu(batchnorm2d(conv2d(x)))  — BN in eval mode (running stats)."""
    N, C_in, H, W = x_nchw.shape
    C_out, _, KH, KW = w_oihw.shape
    HW = H * W
    K = KH * KW * C_in

    # ---- fold BN into the conv (scale -> weights, shift -> bias) ----
    inv_std = lax.rsqrt(running_var.astype(jnp.float32) + eps)
    scale = gamma.astype(jnp.float32) * inv_std                          # (C_out,)
    bias = beta.astype(jnp.float32) + (
        b_conv.astype(jnp.float32) - running_mean.astype(jnp.float32)) * scale
    w_eff = w_oihw.astype(jnp.float32) * scale[:, None, None, None]      # (O,I,KH,KW)
    # Column order must match the in-kernel tap order: ((kh*KW + kw)*C_in + c).
    w_mat = jnp.transpose(w_eff, (0, 2, 3, 1)).reshape(C_out, K)         # f32
    bias2d = bias.reshape(C_out, 1)

    # ---- batch images into grid steps ----
    if images_per_step is None:
        # One step amortizes the ~0.35us/step overhead for tiny batches;
        # >=2 steps for larger batches so v7x's two TensorCores both get work
        # (no-op on single-TC v5e/v6e).
        images_per_step = N if N <= 2 else pl.cdiv(N, 2)
    B = int(max(1, min(images_per_step, N)))
    n_steps = pl.cdiv(N, B)
    N_pad = n_steps * B

    # Free (metadata-only) reshape; no transpose / pad passes through HBM
    # except the (rare) batch-padding when N is not divisible by B.
    x_flat = x_nchw.reshape(N, C_in, HW).astype(jnp.float32)
    if N_pad != N:
        x_flat = jnp.pad(x_flat, ((0, N_pad - N), (0, 0), (0, 0)))

    kernel = functools.partial(conv_block_kernel, H=H, W=W, KH=KH, KW=KW,
                               C_in=C_in, C_out=C_out, B=B)

    out_flat = pl.pallas_call(
        kernel,
        out_shape=jax.ShapeDtypeStruct((N_pad, C_out, HW), jnp.float32),
        grid_spec=pltpu.PrefetchScalarGridSpec(
            num_scalar_prefetch=0,
            grid=(n_steps,),
            in_specs=[
                pl.BlockSpec((B, C_in, HW), lambda n: (n, 0, 0)),
                pl.BlockSpec((C_out, K), lambda n: (0, 0)),
                pl.BlockSpec((C_out, 1), lambda n: (0, 0)),
            ],
            out_specs=pl.BlockSpec((B, C_out, HW), lambda n: (n, 0, 0)),
            scratch_shapes=[
                pltpu.VMEM((C_in, B * HW), jnp.float32),       # merged images
                pltpu.VMEM((K, B * HW), jnp.float32),          # im2col slab
            ],
        ),
        compiler_params=pltpu.CompilerParams(
            dimension_semantics=("parallel",)),
    )(x_flat, w_mat, bias2d)

    out_flat = out_flat[:N] if N_pad != N else out_flat
    return out_flat.reshape(N, C_out, H, W)         # free reshape back to NCHW


def conv_block_reference(x, w, b_conv, gamma, beta, rm, rv, eps=1e-5):
    """Pure-JAX reference matching PyTorch eval-mode ConvBlock.forward."""
    y = lax.conv_general_dilated(
        x.astype(jnp.float32), w.astype(jnp.float32),
        window_strides=(1, 1), padding=((1, 1), (1, 1)),
        dimension_numbers=('NCHW', 'OIHW', 'NCHW'))
    y = y + b_conv.reshape(1, -1, 1, 1)
    y = (y - rm.reshape(1, -1, 1, 1)) / jnp.sqrt(rv.reshape(1, -1, 1, 1) + eps)
    y = y * gamma.reshape(1, -1, 1, 1) + beta.reshape(1, -1, 1, 1)
    return jnp.maximum(y, 0.0)


if __name__ == "__main__":
    # Small shapes consistent with ConvBlock(in_channels=4, out_channels=8).
    N, C_in, H, W = 2, 4, 16, 16
    C_out, KH, KW = 8, 3, 3

    key = jax.random.PRNGKey(0)
    k_x, k_w, k_b, k_g, k_be, k_rm, k_rv = jax.random.split(key, 7)

    x = jax.random.normal(k_x, (N, C_in, H, W), dtype=jnp.float32)
    # Deterministic synthetic parameters (shapes per nn.Conv2d / nn.BatchNorm2d).
    w = jax.random.normal(k_w, (C_out, C_in, KH, KW), dtype=jnp.float32) * 0.1
    b_conv = jax.random.normal(k_b, (C_out,), dtype=jnp.float32) * 0.1
    gamma = 1.0 + 0.1 * jax.random.normal(k_g, (C_out,), dtype=jnp.float32)
    beta = 0.1 * jax.random.normal(k_be, (C_out,), dtype=jnp.float32)
    running_mean = 0.1 * jax.random.normal(k_rm, (C_out,), dtype=jnp.float32)
    running_var = 0.5 + jnp.abs(jax.random.normal(k_rv, (C_out,),
                                                  dtype=jnp.float32))

    out = conv_block_forward(x, w, b_conv, gamma, beta,
                             running_mean, running_var)
    out = jax.block_until_ready(out)

    ref = conv_block_reference(x, w, b_conv, gamma, beta,
                               running_mean, running_var)
    assert out.shape == (N, C_out, H, W)
    # f32 slab + f32 matmul: only accumulation-order / BN-folding differences
    # remain vs the XLA conv reference.
    assert jnp.allclose(out, ref, atol=1e-3, rtol=1e-3), "mismatch vs reference"
    print("KERNEL_OK")
</pallas_src>

<mosaic_0001>
module attributes {stable_mosaic.version = 11 : i64} {
  func.func @conv_block_kernel(%arg0: i32, %arg1: memref<2x4x256xf32, #tpu.memory_space<vmem>>, %arg2: memref<8x36xf32, #tpu.memory_space<vmem>>, %arg3: memref<8x1xf32, #tpu.memory_space<vmem>>, %arg4: memref<2x8x256xf32, #tpu.memory_space<vmem>>, %arg5: memref<4x512xf32, #tpu.memory_space<vmem>>, %arg6: memref<36x512xf32, #tpu.memory_space<vmem>>) attributes {dimension_semantics = [#tpu.dimension_semantics<parallel>], iteration_bounds = array<i64: 1>, scalar_prefetch = 0 : i64, scratch_operands = 2 : i64, tpu.core_type = #tpu.core_type<tc>, window_params = [{transform_indices = @transform_0, window_bounds = array<i64: 2, 4, 256>}, {pipeline_mode = #tpu.pipeline_mode<synchronous>, transform_indices = @transform_1, window_bounds = array<i64: 8, 36>}, {pipeline_mode = #tpu.pipeline_mode<synchronous>, transform_indices = @transform_2, window_bounds = array<i64: 8, 1>}, {transform_indices = @transform_3, window_bounds = array<i64: 2, 8, 256>}]} {
    %c0 = arith.constant 0 : index
    %c0_0 = arith.constant 0 : index
    %c0_1 = arith.constant 0 : index
    %0 = vector.load %arg1[%c0, %c0_0, %c0_1] : memref<2x4x256xf32, #tpu.memory_space<vmem>>, vector<1x4x256xf32>
    %1 = vector.shape_cast %0 : vector<1x4x256xf32> to vector<4x256xf32>
    %c0_2 = arith.constant 0 : index
    %c0_3 = arith.constant 0 : index
    %2 = vector.load %arg5[%c0_2, %c0_3] : memref<4x512xf32, #tpu.memory_space<vmem>>, vector<4x256xf32>
    tpu.vector_store %arg5[%c0_2, %c0_3], %1 {strides = array<i32>} : memref<4x512xf32, #tpu.memory_space<vmem>>, vector<4x256xf32>,
    %c1 = arith.constant 1 : index
    %c0_4 = arith.constant 0 : index
    %c0_5 = arith.constant 0 : index
    %3 = vector.load %arg1[%c1, %c0_4, %c0_5] : memref<2x4x256xf32, #tpu.memory_space<vmem>>, vector<1x4x256xf32>
    %4 = vector.shape_cast %3 : vector<1x4x256xf32> to vector<4x256xf32>
    %c0_6 = arith.constant 0 : index
    %c256 = arith.constant 256 : index
    %5 = vector.load %arg5[%c0_6, %c256] : memref<4x512xf32, #tpu.memory_space<vmem>>, vector<4x256xf32>
    tpu.vector_store %arg5[%c0_6, %c256], %4 {strides = array<i32>} : memref<4x512xf32, #tpu.memory_space<vmem>>, vector<4x256xf32>,
    %c0_7 = arith.constant 0 : index
    %c0_8 = arith.constant 0 : index
    %6 = vector.load %arg5[%c0_7, %c0_8] : memref<4x512xf32, #tpu.memory_space<vmem>>, vector<4x512xf32>
    %7 = tpu.iota {dimensions = array<i32: 1>} : vector<1x512xi32>
    %8 = arith.sitofp %7 : vector<1x512xi32> to vector<1x512xf32>
    %cst = arith.constant 5.000000e-01 : f32
    %9 = vector.broadcast %cst : f32 to vector<1x512xf32>
    %10 = arith.addf %8, %9 : vector<1x512xf32>
    %cst_9 = arith.constant 6.250000e-02 : f32
    %11 = vector.broadcast %cst_9 : f32 to vector<1x512xf32>
    %12 = arith.mulf %10, %11 : vector<1x512xf32>
    %13 = math.floor %12 : vector<1x512xf32>
    %cst_10 = arith.constant 5.000000e-01 : f32
    %14 = vector.broadcast %cst_10 : f32 to vector<1x512xf32>
    %15 = arith.addf %13, %14 : vector<1x512xf32>
    %cst_11 = arith.constant 6.250000e-02 : f32
    %16 = vector.broadcast %cst_11 : f32 to vector<1x512xf32>
    %17 = arith.mulf %15, %16 : vector<1x512xf32>
    %18 = math.floor %17 : vector<1x512xf32>
    %cst_12 = arith.constant 1.600000e+01 : f32
    %19 = vector.broadcast %cst_12 : f32 to vector<1x512xf32>
    %20 = arith.mulf %18, %19 : vector<1x512xf32>
    %21 = arith.subf %13, %20 : vector<1x512xf32>
    %cst_13 = arith.constant 1.600000e+01 : f32
    %22 = vector.broadcast %cst_13 : f32 to vector<1x512xf32>
    %23 = arith.mulf %13, %22 : vector<1x512xf32>
    %24 = arith.subf %8, %23 : vector<1x512xf32>
    %c17_i32 = arith.constant 17 : i32
    %25 = tpu.dynamic_rotate %6 by %c17_i32 dim 1 : vector<4x512xf32>, i32 -> vector<4x512xf32>
    %cst_14 = arith.constant -1.000000e+00 : f32
    %26 = vector.broadcast %cst_14 : f32 to vector<1x512xf32>
    %27 = arith.addf %21, %26 : vector<1x512xf32>
    %cst_15 = arith.constant 0.000000e+00 : f32
    %28 = vector.broadcast %cst_15 : f32 to vector<1x512xf32>
    %29 = arith.cmpf oge, %27, %28 : vector<1x512xf32>
    %cst_16 = arith.constant -1.000000e+00 : f32
    %30 = vector.broadcast %cst_16 : f32 to vector<1x512xf32>
    %31 = arith.addf %21, %30 : vector<1x512xf32>
    %cst_17 = arith.constant 1.600000e+01 : f32
    %32 = vector.broadcast %cst_17 : f32 to vector<1x512xf32>
    %33 = arith.cmpf olt, %31, %32 : vector<1x512xf32>
    %34 = arith.andi %29, %33 : vector<1x512xi1>
    %cst_18 = arith.constant -1.000000e+00 : f32
    %35 = vector.broadcast %cst_18 : f32 to vector<1x512xf32>
    %36 = arith.addf %24, %35 : vector<1x512xf32>
    %cst_19 = arith.constant 0.000000e+00 : f32
    %37 = vector.broadcast %cst_19 : f32 to vector<1x512xf32>
    %38 = arith.cmpf oge, %36, %37 : vector<1x512xf32>
    %39 = arith.andi %34, %38 : vector<1x512xi1>
    %cst_20 = arith.constant -1.000000e+00 : f32
    %40 = vector.broadcast %cst_20 : f32 to vector<1x512xf32>
    %41 = arith.addf %24, %40 : vector<1x512xf32>
    %cst_21 = arith.constant 1.600000e+01 : f32
    %42 = vector.broadcast %cst_21 : f32 to vector<1x512xf32>
    %43 = arith.cmpf olt, %41, %42 : vector<1x512xf32>
    %44 = arith.andi %39, %43 : vector<1x512xi1>
    %cst_22 = arith.constant 0.000000e+00 : f32
    %45 = vector.shape_cast %44 : vector<1x512xi1> to vector<1x512xi1>
    %46 = vector.broadcast %45 : vector<1x512xi1> to vector<4x512xi1>
    %47 = vector.broadcast %cst_22 : f32 to vector<4x512xf32>
    %48 = arith.select %46, %25, %47 : vector<4x512xi1>, vector<4x512xf32>
    %c0_23 = arith.constant 0 : index
    %c0_24 = arith.constant 0 : index
    %49 = vector.load %arg6[%c0_23, %c0_24] : memref<36x512xf32, #tpu.memory_space<vmem>>, vector<4x512xf32>
    tpu.vector_store %arg6[%c0_23, %c0_24], %48 {strides = array<i32>} : memref<36x512xf32, #tpu.memory_space<vmem>>, vector<4x512xf32>,
    %c16_i32 = arith.constant 16 : i32
    %50 = tpu.dynamic_rotate %6 by %c16_i32 dim 1 : vector<4x512xf32>, i32 -> vector<4x512xf32>
    %cst_25 = arith.constant -1.000000e+00 : f32
    %51 = vector.broadcast %cst_25 : f32 to vector<1x512xf32>
    %52 = arith.addf %21, %51 : vector<1x512xf32>
    %cst_26 = arith.constant 0.000000e+00 : f32
    %53 = vector.broadcast %cst_26 : f32 to vector<1x512xf32>
    %54 = arith.cmpf oge, %52, %53 : vector<1x512xf32>
    %cst_27 = arith.constant -1.000000e+00 : f32
    %55 = vector.broadcast %cst_27 : f32 to vector<1x512xf32>
    %56 = arith.addf %21, %55 : vector<1x512xf32>
    %cst_28 = arith.constant 1.600000e+01 : f32
    %57 = vector.broadcast %cst_28 : f32 to vector<1x512xf32>
    %58 = arith.cmpf olt, %56, %57 : vector<1x512xf32>
    %59 = arith.andi %54, %58 : vector<1x512xi1>
    %cst_29 = arith.constant 0.000000e+00 : f32
    %60 = vector.broadcast %cst_29 : f32 to vector<1x512xf32>
    %61 = arith.addf %24, %60 : vector<1x512xf32>
    %cst_30 = arith.constant 0.000000e+00 : f32
    %62 = vector.broadcast %cst_30 : f32 to vector<1x512xf32>
    %63 = arith.cmpf oge, %61, %62 : vector<1x512xf32>
    %64 = arith.andi %59, %63 : vector<1x512xi1>
    %cst_31 = arith.constant 0.000000e+00 : f32
    %65 = vector.broadcast %cst_31 : f32 to vector<1x512xf32>
    %66 = arith.addf %24, %65 : vector<1x512xf32>
    %cst_32 = arith.constant 1.600000e+01 : f32
    %67 = vector.broadcast %cst_32 : f32 to vector<1x512xf32>
    %68 = arith.cmpf olt, %66, %67 : vector<1x512xf32>
    %69 = arith.andi %64, %68 : vector<1x512xi1>
    %cst_33 = arith.constant 0.000000e+00 : f32
    %70 = vector.shape_cast %69 : vector<1x512xi1> to vector<1x512xi1>
    %71 = vector.broadcast %70 : vector<1x512xi1> to vector<4x512xi1>
    %72 = vector.broadcast %cst_33 : f32 to vector<4x512xf32>
    %73 = arith.select %71, %50, %72 : vector<4x512xi1>, vector<4x512xf32>
    %c4 = arith.constant 4 : index
    %c0_34 = arith.constant 0 : index
    %74 = vector.load %arg6[%c4, %c0_34] : memref<36x512xf32, #tpu.memory_space<vmem>>, vector<4x512xf32>
    tpu.vector_store %arg6[%c4, %c0_34], %73 {strides = array<i32>} : memref<36x512xf32, #tpu.memory_space<vmem>>, vector<4x512xf32>,
    %c15_i32 = arith.constant 15 : i32
    %75 = tpu.dynamic_rotate %6 by %c15_i32 dim 1 : vector<4x512xf32>, i32 -> vector<4x512xf32>
    %cst_35 = arith.constant -1.000000e+00 : f32
    %76 = vector.broadcast %cst_35 : f32 to vector<1x512xf32>
    %77 = arith.addf %21, %76 : vector<1x512xf32>
    %cst_36 = arith.constant 0.000000e+00 : f32
    %78 = vector.broadcast %cst_36 : f32 to vector<1x512xf32>
    %79 = arith.cmpf oge, %77, %78 : vector<1x512xf32>
    %cst_37 = arith.constant -1.000000e+00 : f32
    %80 = vector.broadcast %cst_37 : f32 to vector<1x512xf32>
    %81 = arith.addf %21, %80 : vector<1x512xf32>
    %cst_38 = arith.constant 1.600000e+01 : f32
    %82 = vector.broadcast %cst_38 : f32 to vector<1x512xf32>
    %83 = arith.cmpf olt, %81, %82 : vector<1x512xf32>
    %84 = arith.andi %79, %83 : vector<1x512xi1>
    %cst_39 = arith.constant 1.000000e+00 : f32
    %85 = vector.broadcast %cst_39 : f32 to vector<1x512xf32>
    %86 = arith.addf %24, %85 : vector<1x512xf32>
    %cst_40 = arith.constant 0.000000e+00 : f32
    %87 = vector.broadcast %cst_40 : f32 to vector<1x512xf32>
    %88 = arith.cmpf oge, %86, %87 : vector<1x512xf32>
    %89 = arith.andi %84, %88 : vector<1x512xi1>
    %cst_41 = arith.constant 1.000000e+00 : f32
    %90 = vector.broadcast %cst_41 : f32 to vector<1x512xf32>
    %91 = arith.addf %24, %90 : vector<1x512xf32>
    %cst_42 = arith.constant 1.600000e+01 : f32
    %92 = vector.broadcast %cst_42 : f32 to vector<1x512xf32>
    %93 = arith.cmpf olt, %91, %92 : vector<1x512xf32>
    %94 = arith.andi %89, %93 : vector<1x512xi1>
    %cst_43 = arith.constant 0.000000e+00 : f32
    %95 = vector.shape_cast %94 : vector<1x512xi1> to vector<1x512xi1>
    %96 = vector.broadcast %95 : vector<1x512xi1> to vector<4x512xi1>
    %97 = vector.broadcast %cst_43 : f32 to vector<4x512xf32>
    %98 = arith.select %96, %75, %97 : vector<4x512xi1>, vector<4x512xf32>
    %c8 = arith.constant 8 : index
    %c0_44 = arith.constant 0 : index
    %99 = vector.load %arg6[%c8, %c0_44] : memref<36x512xf32, #tpu.memory_space<vmem>>, vector<4x512xf32>
    tpu.vector_store %arg6[%c8, %c0_44], %98 {strides = array<i32>} : memref<36x512xf32, #tpu.memory_space<vmem>>, vector<4x512xf32>,
    %c1_i32 = arith.constant 1 : i32
    %100 = tpu.dynamic_rotate %6 by %c1_i32 dim 1 : vector<4x512xf32>, i32 -> vector<4x512xf32>
    %cst_45 = arith.constant 0.000000e+00 : f32
    %101 = vector.broadcast %cst_45 : f32 to vector<1x512xf32>
    %102 = arith.addf %21, %101 : vector<1x512xf32>
    %cst_46 = arith.constant 0.000000e+00 : f32
    %103 = vector.broadcast %cst_46 : f32 to vector<1x512xf32>
    %104 = arith.cmpf oge, %102, %103 : vector<1x512xf32>
    %cst_47 = arith.constant 0.000000e+00 : f32
    %105 = vector.broadcast %cst_47 : f32 to vector<1x512xf32>
    %106 = arith.addf %21, %105 : vector<1x512xf32>
    %cst_48 = arith.constant 1.600000e+01 : f32
    %107 = vector.broadcast %cst_48 : f32 to vector<1x512xf32>
    %108 = arith.cmpf olt, %106, %107 : vector<1x512xf32>
    %109 = arith.andi %104, %108 : vector<1x512xi1>
    %cst_49 = arith.constant -1.000000e+00 : f32
    %110 = vector.broadcast %cst_49 : f32 to vector<1x512xf32>
    %111 = arith.addf %24, %110 : vector<1x512xf32>
    %cst_50 = arith.constant 0.000000e+00 : f32
    %112 = vector.broadcast %cst_50 : f32 to vector<1x512xf32>
    %113 = arith.cmpf oge, %111, %112 : vector<1x512xf32>
    %114 = arith.andi %109, %113 : vector<1x512xi1>
    %cst_51 = arith.constant -1.000000e+00 : f32
    %115 = vector.broadcast %cst_51 : f32 to vector<1x512xf32>
    %116 = arith.addf %24, %115 : vector<1x512xf32>
    %cst_52 = arith.constant 1.600000e+01 : f32
    %117 = vector.broadcast %cst_52 : f32 to vector<1x512xf32>
    %118 = arith.cmpf olt, %116, %117 : vector<1x512xf32>
    %119 = arith.andi %114, %118 : vector<1x512xi1>
    %cst_53 = arith.constant 0.000000e+00 : f32
    %120 = vector.shape_cast %119 : vector<1x512xi1> to vector<1x512xi1>
    %121 = vector.broadcast %120 : vector<1x512xi1> to vector<4x512xi1>
    %122 = vector.broadcast %cst_53 : f32 to vector<4x512xf32>
    %123 = arith.select %121, %100, %122 : vector<4x512xi1>, vector<4x512xf32>
    %c12 = arith.constant 12 : index
    %c0_54 = arith.constant 0 : index
    %124 = vector.load %arg6[%c12, %c0_54] : memref<36x512xf32, #tpu.memory_space<vmem>>, vector<4x512xf32>
    tpu.vector_store %arg6[%c12, %c0_54], %123 {strides = array<i32>} : memref<36x512xf32, #tpu.memory_space<vmem>>, vector<4x512xf32>,
    %c16 = arith.constant 16 : index
    %c0_55 = arith.constant 0 : index
    %125 = vector.load %arg6[%c16, %c0_55] : memref<36x512xf32, #tpu.memory_space<vmem>>, vector<4x512xf32>
    tpu.vector_store %arg6[%c16, %c0_55], %6 {strides = array<i32>} : memref<36x512xf32, #tpu.memory_space<vmem>>, vector<4x512xf32>,
    %c511_i32 = arith.constant 511 : i32
    %126 = tpu.dynamic_rotate %6 by %c511_i32 dim 1 : vector<4x512xf32>, i32 -> vector<4x512xf32>
    %cst_56 = arith.constant 0.000000e+00 : f32
    %127 = vector.broadcast %cst_56 : f32 to vector<1x512xf32>
    %128 = arith.addf %21, %127 : vector<1x512xf32>
    %cst_57 = arith.constant 0.000000e+00 : f32
    %129 = vector.broadcast %cst_57 : f32 to vector<1x512xf32>
    %130 = arith.cmpf oge, %128, %129 : vector<1x512xf32>
    %cst_58 = arith.constant 0.000000e+00 : f32
    %131 = vector.broadcast %cst_58 : f32 to vector<1x512xf32>
    %132 = arith.addf %21, %131 : vector<1x512xf32>
    %cst_59 = arith.constant 1.600000e+01 : f32
    %133 = vector.broadcast %cst_59 : f32 to vector<1x512xf32>
    %134 = arith.cmpf olt, %132, %133 : vector<1x512xf32>
    %135 = arith.andi %130, %134 : vector<1x512xi1>
    %cst_60 = arith.constant 1.000000e+00 : f32
    %136 = vector.broadcast %cst_60 : f32 to vector<1x512xf32>
    %137 = arith.addf %24, %136 : vector<1x512xf32>
    %cst_61 = arith.constant 0.000000e+00 : f32
    %138 = vector.broadcast %cst_61 : f32 to vector<1x512xf32>
    %139 = arith.cmpf oge, %137, %138 : vector<1x512xf32>
    %140 = arith.andi %135, %139 : vector<1x512xi1>
    %cst_62 = arith.constant 1.000000e+00 : f32
    %141 = vector.broadcast %cst_62 : f32 to vector<1x512xf32>
    %142 = arith.addf %24, %141 : vector<1x512xf32>
    %cst_63 = arith.constant 1.600000e+01 : f32
    %143 = vector.broadcast %cst_63 : f32 to vector<1x512xf32>
    %144 = arith.cmpf olt, %142, %143 : vector<1x512xf32>
    %145 = arith.andi %140, %144 : vector<1x512xi1>
    %cst_64 = arith.constant 0.000000e+00 : f32
    %146 = vector.shape_cast %145 : vector<1x512xi1> to vector<1x512xi1>
    %147 = vector.broadcast %146 : vector<1x512xi1> to vector<4x512xi1>
    %148 = vector.broadcast %cst_64 : f32 to vector<4x512xf32>
    %149 = arith.select %147, %126, %148 : vector<4x512xi1>, vector<4x512xf32>
    %c20 = arith.constant 20 : index
    %c0_65 = arith.constant 0 : index
    %150 = vector.load %arg6[%c20, %c0_65] : memref<36x512xf32, #tpu.memory_space<vmem>>, vector<4x512xf32>
    tpu.vector_store %arg6[%c20, %c0_65], %149 {strides = array<i32>} : memref<36x512xf32, #tpu.memory_space<vmem>>, vector<4x512xf32>,
    %c497_i32 = arith.constant 497 : i32
    %151 = tpu.dynamic_rotate %6 by %c497_i32 dim 1 : vector<4x512xf32>, i32 -> vector<4x512xf32>
    %cst_66 = arith.constant 1.000000e+00 : f32
    %152 = vector.broadcast %cst_66 : f32 to vector<1x512xf32>
    %153 = arith.addf %21, %152 : vector<1x512xf32>
    %cst_67 = arith.constant 0.000000e+00 : f32
    %154 = vector.broadcast %cst_67 : f32 to vector<1x512xf32>
    %155 = arith.cmpf oge, %153, %154 : vector<1x512xf32>
    %cst_68 = arith.constant 1.000000e+00 : f32
    %156 = vector.broadcast %cst_68 : f32 to vector<1x512xf32>
    %157 = arith.addf %21, %156 : vector<1x512xf32>
    %cst_69 = arith.constant 1.600000e+01 : f32
    %158 = vector.broadcast %cst_69 : f32 to vector<1x512xf32>
    %159 = arith.cmpf olt, %157, %158 : vector<1x512xf32>
    %160 = arith.andi %155, %159 : vector<1x512xi1>
    %cst_70 = arith.constant -1.000000e+00 : f32
    %161 = vector.broadcast %cst_70 : f32 to vector<1x512xf32>
    %162 = arith.addf %24, %161 : vector<1x512xf32>
    %cst_71 = arith.constant 0.000000e+00 : f32
    %163 = vector.broadcast %cst_71 : f32 to vector<1x512xf32>
    %164 = arith.cmpf oge, %162, %163 : vector<1x512xf32>
    %165 = arith.andi %160, %164 : vector<1x512xi1>
    %cst_72 = arith.constant -1.000000e+00 : f32
    %166 = vector.broadcast %cst_72 : f32 to vector<1x512xf32>
    %167 = arith.addf %24, %166 : vector<1x512xf32>
    %cst_73 = arith.constant 1.600000e+01 : f32
    %168 = vector.broadcast %cst_73 : f32 to vector<1x512xf32>
    %169 = arith.cmpf olt, %167, %168 : vector<1x512xf32>
    %170 = arith.andi %165, %169 : vector<1x512xi1>
    %cst_74 = arith.constant 0.000000e+00 : f32
    %171 = vector.shape_cast %170 : vector<1x512xi1> to vector<1x512xi1>
    %172 = vector.broadcast %171 : vector<1x512xi1> to vector<4x512xi1>
    %173 = vector.broadcast %cst_74 : f32 to vector<4x512xf32>
    %174 = arith.select %172, %151, %173 : vector<4x512xi1>, vector<4x512xf32>
    %c24 = arith.constant 24 : index
    %c0_75 = arith.constant 0 : index
    %175 = vector.load %arg6[%c24, %c0_75] : memref<36x512xf32, #tpu.memory_space<vmem>>, vector<4x512xf32>
    tpu.vector_store %arg6[%c24, %c0_75], %174 {strides = array<i32>} : memref<36x512xf32, #tpu.memory_space<vmem>>, vector<4x512xf32>,
    %c496_i32 = arith.constant 496 : i32
    %176 = tpu.dynamic_rotate %6 by %c496_i32 dim 1 : vector<4x512xf32>, i32 -> vector<4x512xf32>
    %cst_76 = arith.constant 1.000000e+00 : f32
    %177 = vector.broadcast %cst_76 : f32 to vector<1x512xf32>
    %178 = arith.addf %21, %177 : vector<1x512xf32>
    %cst_77 = arith.constant 0.000000e+00 : f32
    %179 = vector.broadcast %cst_77 : f32 to vector<1x512xf32>
    %180 = arith.cmpf oge, %178, %179 : vector<1x512xf32>
    %cst_78 = arith.constant 1.000000e+00 : f32
    %181 = vector.broadcast %cst_78 : f32 to vector<1x512xf32>
    %182 = arith.addf %21, %181 : vector<1x512xf32>
    %cst_79 = arith.constant 1.600000e+01 : f32
    %183 = vector.broadcast %cst_79 : f32 to vector<1x512xf32>
    %184 = arith.cmpf olt, %182, %183 : vector<1x512xf32>
    %185 = arith.andi %180, %184 : vector<1x512xi1>
    %cst_80 = arith.constant 0.000000e+00 : f32
    %186 = vector.broadcast %cst_80 : f32 to vector<1x512xf32>
    %187 = arith.addf %24, %186 : vector<1x512xf32>
    %cst_81 = arith.constant 0.000000e+00 : f32
    %188 = vector.broadcast %cst_81 : f32 to vector<1x512xf32>
    %189 = arith.cmpf oge, %187, %188 : vector<1x512xf32>
    %190 = arith.andi %185, %189 : vector<1x512xi1>
    %cst_82 = arith.constant 0.000000e+00 : f32
    %191 = vector.broadcast %cst_82 : f32 to vector<1x512xf32>
    %192 = arith.addf %24, %191 : vector<1x512xf32>
    %cst_83 = arith.constant 1.600000e+01 : f32
    %193 = vector.broadcast %cst_83 : f32 to vector<1x512xf32>
    %194 = arith.cmpf olt, %192, %193 : vector<1x512xf32>
    %195 = arith.andi %190, %194 : vector<1x512xi1>
    %cst_84 = arith.constant 0.000000e+00 : f32
    %196 = vector.shape_cast %195 : vector<1x512xi1> to vector<1x512xi1>
    %197 = vector.broadcast %196 : vector<1x512xi1> to vector<4x512xi1>
    %198 = vector.broadcast %cst_84 : f32 to vector<4x512xf32>
    %199 = arith.select %197, %176, %198 : vector<4x512xi1>, vector<4x512xf32>
    %c28 = arith.constant 28 : index
    %c0_85 = arith.constant 0 : index
    %200 = vector.load %arg6[%c28, %c0_85] : memref<36x512xf32, #tpu.memory_space<vmem>>, vector<4x512xf32>
    tpu.vector_store %arg6[%c28, %c0_85], %199 {strides = array<i32>} : memref<36x512xf32, #tpu.memory_space<vmem>>, vector<4x512xf32>,
    %c495_i32 = arith.constant 495 : i32
    %201 = tpu.dynamic_rotate %6 by %c495_i32 dim 1 : vector<4x512xf32>, i32 -> vector<4x512xf32>
    %cst_86 = arith.constant 1.000000e+00 : f32
    %202 = vector.broadcast %cst_86 : f32 to vector<1x512xf32>
    %203 = arith.addf %21, %202 : vector<1x512xf32>
    %cst_87 = arith.constant 0.000000e+00 : f32
    %204 = vector.broadcast %cst_87 : f32 to vector<1x512xf32>
    %205 = arith.cmpf oge, %203, %204 : vector<1x512xf32>
    %cst_88 = arith.constant 1.000000e+00 : f32
    %206 = vector.broadcast %cst_88 : f32 to vector<1x512xf32>
    %207 = arith.addf %21, %206 : vector<1x512xf32>
    %cst_89 = arith.constant 1.600000e+01 : f32
    %208 = vector.broadcast %cst_89 : f32 to vector<1x512xf32>
    %209 = arith.cmpf olt, %207, %208 : vector<1x512xf32>
    %210 = arith.andi %205, %209 : vector<1x512xi1>
    %cst_90 = arith.constant 1.000000e+00 : f32
    %211 = vector.broadcast %cst_90 : f32 to vector<1x512xf32>
    %212 = arith.addf %24, %211 : vector<1x512xf32>
    %cst_91 = arith.constant 0.000000e+00 : f32
    %213 = vector.broadcast %cst_91 : f32 to vector<1x512xf32>
    %214 = arith.cmpf oge, %212, %213 : vector<1x512xf32>
    %215 = arith.andi %210, %214 : vector<1x512xi1>
    %cst_92 = arith.constant 1.000000e+00 : f32
    %216 = vector.broadcast %cst_92 : f32 to vector<1x512xf32>
    %217 = arith.addf %24, %216 : vector<1x512xf32>
    %cst_93 = arith.constant 1.600000e+01 : f32
    %218 = vector.broadcast %cst_93 : f32 to vector<1x512xf32>
    %219 = arith.cmpf olt, %217, %218 : vector<1x512xf32>
    %220 = arith.andi %215, %219 : vector<1x512xi1>
    %cst_94 = arith.constant 0.000000e+00 : f32
    %221 = vector.shape_cast %220 : vector<1x512xi1> to vector<1x512xi1>
    %222 = vector.broadcast %221 : vector<1x512xi1> to vector<4x512xi1>
    %223 = vector.broadcast %cst_94 : f32 to vector<4x512xf32>
    %224 = arith.select %222, %201, %223 : vector<4x512xi1>, vector<4x512xf32>
    %c32 = arith.constant 32 : index
    %c0_95 = arith.constant 0 : index
    %225 = vector.load %arg6[%c32, %c0_95] : memref<36x512xf32, #tpu.memory_space<vmem>>, vector<4x512xf32>
    tpu.vector_store %arg6[%c32, %c0_95], %224 {strides = array<i32>} : memref<36x512xf32, #tpu.memory_space<vmem>>, vector<4x512xf32>,
    %c0_96 = arith.constant 0 : index
    %c0_97 = arith.constant 0 : index
    %226 = vector.load %arg2[%c0_96, %c0_97] : memref<8x36xf32, #tpu.memory_space<vmem>>, vector<8x36xf32>
    %c0_98 = arith.constant 0 : index
    %c0_99 = arith.constant 0 : index
    %227 = vector.load %arg6[%c0_98, %c0_99] : memref<36x512xf32, #tpu.memory_space<vmem>>, vector<36x512xf32>
    %cst_100 = arith.constant dense<0.000000e+00> : vector<8x512xf32>
    %228 = tpu.matmul %226, %227, %cst_100 {dimension_numbers = #tpu.dot_dimension_numbers<[1], [0], [0], [1], [0, 0, 1, 1], [], []>} : vector<8x36xf32>, vector<36x512xf32>, vector<8x512xf32> -> vector<8x512xf32>
    %c0_101 = arith.constant 0 : index
    %c0_102 = arith.constant 0 : index
    %229 = vector.load %arg3[%c0_101, %c0_102] : memref<8x1xf32, #tpu.memory_space<vmem>>, vector<8x1xf32>
    %230 = vector.broadcast %229 : vector<8x1xf32> to vector<8x512xf32>
    %231 = arith.addf %228, %230 : vector<8x512xf32>
    %cst_103 = arith.constant 0.000000e+00 : f32
    %232 = vector.broadcast %cst_103 : f32 to vector<8x512xf32>
    %233 = arith.maximumf %231, %232 : vector<8x512xf32>
    %234 = vector.extract_strided_slice %233 {offsets = [0, 0], sizes = [8, 256], strides = [1, 1]} : vector<8x512xf32> to vector<8x256xf32>
    %c0_104 = arith.constant 0 : index
    %c0_105 = arith.constant 0 : index
    %c0_106 = arith.constant 0 : index
    %235 = vector.load %arg4[%c0_104, %c0_105, %c0_106] : memref<2x8x256xf32, #tpu.memory_space<vmem>>, vector<1x8x256xf32>
    %236 = vector.shape_cast %235 : vector<1x8x256xf32> to vector<8x256xf32>
    %237 = vector.shape_cast %234 : vector<8x256xf32> to vector<1x8x256xf32>
    tpu.vector_store %arg4[%c0_104, %c0_105, %c0_106], %237 {strides = array<i32>} : memref<2x8x256xf32, #tpu.memory_space<vmem>>, vector<1x8x256xf32>,
    %238 = vector.extract_strided_slice %233 {offsets = [0, 256], sizes = [8, 256], strides = [1, 1]} : vector<8x512xf32> to vector<8x256xf32>
    %c1_107 = arith.constant 1 : index
    %c0_108 = arith.constant 0 : index
    %c0_109 = arith.constant 0 : index
    %239 = vector.load %arg4[%c1_107, %c0_108, %c0_109] : memref<2x8x256xf32, #tpu.memory_space<vmem>>, vector<1x8x256xf32>
    %240 = vector.shape_cast %239 : vector<1x8x256xf32> to vector<8x256xf32>
    %241 = vector.shape_cast %238 : vector<8x256xf32> to vector<1x8x256xf32>
    tpu.vector_store %arg4[%c1_107, %c0_108, %c0_109], %241 {strides = array<i32>} : memref<2x8x256xf32, #tpu.memory_space<vmem>>, vector<1x8x256xf32>,
    return
  }
  func.func @transform_0(%arg0: i32) -> (i32, i32, i32) {
    %c0_i32 = arith.constant 0 : i32
    %c0_i32_0 = arith.constant 0 : i32
    %c0_i32_1 = arith.constant 0 : i32
    return %arg0, %c0_i32, %c0_i32_0 : i32, i32, i32
  }
  func.func @transform_1(%arg0: i32) -> (i32, i32) {
    %c0_i32 = arith.constant 0 : i32
    %c0_i32_0 = arith.constant 0 : i32
    %c0_i32_1 = arith.constant 0 : i32
    return %c0_i32, %c0_i32_0 : i32, i32
  }
  func.func @transform_2(%arg0: i32) -> (i32, i32) {
    %c0_i32 = arith.constant 0 : i32
    %c0_i32_0 = arith.constant 0 : i32
    %c0_i32_1 = arith.constant 0 : i32
    return %c0_i32, %c0_i32_0 : i32, i32
  }
  func.func @transform_3(%arg0: i32) -> (i32, i32, i32) {
    %c0_i32 = arith.constant 0 : i32
    %c0_i32_0 = arith.constant 0 : i32
    %c0_i32_1 = arith.constant 0 : i32
    return %arg0, %c0_i32, %c0_i32_0 : i32, i32, i32
  }
}

</mosaic_0001>

<llo_original>
// kernel: tpu_custom_call.1
$region0: #{tpu_custom_call.1}
  #allocation0 [shape = 'u32[]', space=smem, size = 0x4, offset = 0x4, fixed_abs, tag = 'smem constant byte address 0x4 - core index']
  #allocation1 [shape = 'u32[144,128]{1,0:T(1,128)}', space=vmem, size = 0x12000, scoped, tag = 'internal scratch']
  #allocation2 [shape = 'f32[4,512]{1,0:T(4,128)}', space=vmem, size = 0x2000, scoped, tag = 'scratch operand']
  #allocation3 [shape = 'f32[36,512]{1,0:T(8,128)}', space=vmem, size = 0x14000, scoped, tag = 'scratch operand']
  %s0 = inlined_call_operand.hbm [shape: f32[2,4,256], index: 0, kind: input, shape index: {}]
  %s1 = inlined_call_operand.vmem [shape: f32[8,36], index: 1, kind: input, shape index: {}]
  %s2 = inlined_call_operand.vmem [shape: f32[8,1], index: 2, kind: input, shape index: {}]
  %s3 = inlined_call_operand.hbm [shape: f32[2,8,256], index: 3, kind: output, shape index: {}]
  %s4 = sld [smem:[#allocation0]]
  $region26: #{tpu_custom_call.1} parent=0
    _
  %s6 = ssub.s32 1, %s4
  %s7 = scalar_select 0, %s6, %s4
  $region1: #{tpu_custom_call.1} parent=0
    #allocation4 [shape = 'u8[8192]{0}', space=vmem, size = 0x2000, scoped, tag = 'input window, operand 0, single buffered']
    #allocation5 [shape = 's32[1]{0}', space=sflag, size = 0x4, scoped, tag = 'scoped memory for tpu_custom_call.1']
    #allocation6 [shape = 's32[1]{0}', space=sflag, size = 0x4, scoped, tag = 'scoped memory for tpu_custom_call.1']
    #allocation7 [shape = 'u8[16384]{0}', space=vmem, size = 0x4000, scoped, tag = 'output window, operand 0, single buffered']
    %8 = vsyncpa [#allocation5], 0
    %9 = vsyncpa [#allocation6], 0
    // Predicated region
    $region2: #{tpu_custom_call.1} parent=1 // pred_check
      _
    $region3: #{tpu_custom_call.1} parent=1 // pred_check_branch
      %11 = sbr.rel (0) target = $region5
    $region4: #{tpu_custom_call.1} parent=1 // pred_region
      %s13 = ssub.s32 256, 256
      %14 = vsyncadd [#allocation5], %s13
      %s15 = sshll.u32 [#allocation4], 4
      %s16 = int_to_ptr.vmem [resolvable:$true] %s15
      %21 = dma.hbm_to_vmem [thread:$0]  %s0, 256, %s16, [#allocation5], 128, 128, 8
    $region5: #{tpu_custom_call.1} parent=1 // pred_fallthru
      _
    // Predicated region
    $region6: #{tpu_custom_call.1} parent=1 // pred_check
      _
    $region7: #{tpu_custom_call.1} parent=1 // pred_check_branch
      %23 = sbr.rel (0) target = $region9
    $region8: #{tpu_custom_call.1} parent=1 // pred_region
      _
    $region9: #{tpu_custom_call.1} parent=1 // pred_fallthru
      _
    // Predicated region
    $region10: #{tpu_custom_call.1} parent=1 // pred_check
      _
    $region11: #{tpu_custom_call.1} parent=1 // pred_check_branch
      %25 = sbr.rel (0) target = $region13
    $region12: #{tpu_custom_call.1} parent=1 // pred_region
      _
    $region13: #{tpu_custom_call.1} parent=1 // pred_fallthru
      _
    // Predicated region
    $region14: #{tpu_custom_call.1} parent=1 // pred_check
      _
    $region15: #{tpu_custom_call.1} parent=1 // pred_check_branch
      %27 = sbr.rel (0) target = $region17
    $region16: #{tpu_custom_call.1} parent=1 // pred_region
      %28 = dma.done [#allocation5], 256
    $region17: #{tpu_custom_call.1} parent=1 // pred_fallthru
      _
    %v29 = vld [vmem:[#allocation4] sm:$0xff]
    %30 = vst [vmem:[#allocation2] sm:$0xff] %v29
    %s31 = scalar_lea.vmem [#allocation4], 8
    %v32 = vld [vmem:[%s31] sm:$0xff]
    %33 = vst [vmem:[#allocation2 + $0x8] sm:$0xff] %v32
    %v34 = vld [vmem:[#allocation2] sm:$0xff]
    %v35 = vld [vmem:[#allocation2 + $0x8] sm:$0xff]
    %v36 = vlaneseq
    %v37 = vand.u32 %v36, 127
    %v38 = vadd.s32 %v37, 128
    %v39 = vadd.s32 %v37, 256
    %v40 = vadd.s32 %v37, 384
    %v41 = vcvt.s32.f32 %v37
    %v42 = vcvt.s32.f32 %v38
    %v43 = vcvt.s32.f32 %v39
    %v44 = vcvt.s32.f32 %v40
    %v45 = vadd.f32 %v41, 0.5
    %v46 = vadd.f32 %v42, 0.5
    %v47 = vadd.f32 %v43, 0.5
    %v48 = vadd.f32 %v44, 0.5
    %v49 = vmul.f32 %v45, 0.0625
    %v50 = vmul.f32 %v46, 0.0625
    %v51 = vmul.f32 %v47, 0.0625
    %v52 = vmul.f32 %v48, 0.0625
    %v53 = vfloor.f32 %v49
    %v54 = vfloor.f32 %v50
    %v55 = vfloor.f32 %v51
    %v56 = vfloor.f32 %v52
    %v57 = vadd.f32 %v53, 0.5
    %v58 = vadd.f32 %v54, 0.5
    %v59 = vadd.f32 %v55, 0.5
    %v60 = vadd.f32 %v56, 0.5
    %v61 = vmul.f32 %v57, 0.0625
    %v62 = vmul.f32 %v58, 0.0625
    %v63 = vmul.f32 %v59, 0.0625
    %v64 = vmul.f32 %v60, 0.0625
    %v65 = vfloor.f32 %v61
    %v66 = vfloor.f32 %v62
    %v67 = vfloor.f32 %v63
    %v68 = vfloor.f32 %v64
    %v69 = vmul.f32 %v65, 16.0
    %v70 = vmul.f32 %v66, 16.0
    %v71 = vmul.f32 %v67, 16.0
    %v72 = vmul.f32 %v68, 16.0
    %v73 = vsub.f32 %v53, %v69
    %v74 = vsub.f32 %v54, %v70
    %v75 = vsub.f32 %v55, %v71
    %v76 = vsub.f32 %v56, %v72
    %v77 = vmul.f32 %v53, 16.0
    %v78 = vmul.f32 %v54, 16.0
    %v79 = vmul.f32 %v55, 16.0
    %v80 = vmul.f32 %v56, 16.0
    %v81 = vsub.f32 %v41, %v77
    %v82 = vsub.f32 %v42, %v78
    %v83 = vsub.f32 %v43, %v79
    %v84 = vsub.f32 %v44, %v80
    %v87 = vcombine.high %v34, %v34
    %v88 = vcombine.high %v35, %v35
    %91 = vrot.lane.b32.xlu0 %v34, 17
    %v92 = vpop.permute.xlu0 %91
    %93 = vrot.lane.b32.xlu0 %v87, 17
    %v94 = vpop.permute.xlu0 %93
    %95 = vrot.lane.b32.xlu0 %v35, 17
    %v96 = vpop.permute.xlu0 %95
    %97 = vrot.lane.b32.xlu0 %v88, 17
    %v98 = vpop.permute.xlu0 %97
    %vm99 = vcmp.lt.s32.totalorder %v37, 17
    %v100 = vsel %vm99, %v96, %v98
    %v101 = vsel %vm99, %v94, %v96
    %v102 = vsel %vm99, %v92, %v94
    %v103 = vsel %vm99, %v98, %v92
    %v104 = vadd.f32 %v73, -1.0
    %v105 = vadd.f32 %v74, -1.0
    %v106 = vadd.f32 %v75, -1.0
    %v107 = vadd.f32 %v76, -1.0
    %vm108 = vcmp.ge.f32.partialorder %v104, 0.0
    %vm109 = vcmp.ge.f32.partialorder %v105, 0.0
    %vm110 = vcmp.ge.f32.partialorder %v106, 0.0
    %vm111 = vcmp.ge.f32.partialorder %v107, 0.0
    %vm112 = vcmp.lt.f32.partialorder %v104, 16.0
    %vm113 = vcmp.lt.f32.partialorder %v105, 16.0
    %vm114 = vcmp.lt.f32.partialorder %v106, 16.0
    %vm115 = vcmp.lt.f32.partialorder %v107, 16.0
    %vm116 = vmand %vm108, %vm112
    %vm117 = vmand %vm109, %vm113
    %vm118 = vmand %vm110, %vm114
    %vm119 = vmand %vm111, %vm115
    %v120 = vadd.f32 %v81, -1.0
    %v121 = vadd.f32 %v82, -1.0
    %v122 = vadd.f32 %v83, -1.0
    %v123 = vadd.f32 %v84, -1.0
    %vm124 = vcmp.ge.f32.partialorder %v120, 0.0
    %vm125 = vcmp.ge.f32.partialorder %v121, 0.0
    %vm126 = vcmp.ge.f32.partialorder %v122, 0.0
    %vm127 = vcmp.ge.f32.partialorder %v123, 0.0
    %vm128 = vmand %vm116, %vm124
    %vm129 = vmand %vm117, %vm125
    %vm130 = vmand %vm118, %vm126
    %vm131 = vmand %vm119, %vm127
    %vm132 = vcmp.lt.f32.partialorder %v120, 16.0
    %vm133 = vcmp.lt.f32.partialorder %v121, 16.0
    %vm134 = vcmp.lt.f32.partialorder %v122, 16.0
    %vm135 = vcmp.lt.f32.partialorder %v123, 16.0
    %vm136 = vmand %vm128, %vm132
    %vm137 = vmand %vm129, %vm133
    %vm138 = vmand %vm130, %vm134
    %vm139 = vmand %vm131, %vm135
    %v140 = vsel %vm136, 1, 0
    %v141 = vsel %vm137, 1, 0
    %v142 = vsel %vm138, 1, 0
    %v143 = vsel %vm139, 1, 0
    %vm144 = vcmp.eq.s32.totalorder %v140, 1
    %vm145 = vcmp.eq.s32.totalorder %v141, 1
    %vm146 = vcmp.eq.s32.totalorder %v142, 1
    %vm147 = vcmp.eq.s32.totalorder %v143, 1
    %v148 = vsel %vm144, %v103, 0.0
    %v149 = vsel %vm145, %v102, 0.0
    %v150 = vsel %vm146, %v101, 0.0
    %v151 = vsel %vm147, %v100, 0.0
    %152 = vst [vmem:[#allocation3] sm:$0xf] %v148
    %153 = vst [vmem:[#allocation3 + $0x8] sm:$0xf] %v149
    %154 = vst [vmem:[#allocation3 + $0x10] sm:$0xf] %v150
    %155 = vst [vmem:[#allocation3 + $0x18] sm:$0xf] %v151
    %156 = vrot.lane.b32.xlu0 %v34, 16
    %v157 = vpop.permute.xlu0 %156
    %158 = vrot.lane.b32.xlu0 %v87, 16
    %v159 = vpop.permute.xlu0 %158
    %160 = vrot.lane.b32.xlu0 %v35, 16
    %v161 = vpop.permute.xlu0 %160
    %162 = vrot.lane.b32.xlu0 %v88, 16
    %v163 = vpop.permute.xlu0 %162
    %vm164 = vcmp.lt.s32.totalorder %v37, 16
    %v165 = vsel %vm164, %v161, %v163
    %v166 = vsel %vm164, %v159, %v161
    %v167 = vsel %vm164, %v157, %v159
    %v168 = vsel %vm164, %v163, %v157
    %v169 = vadd.f32 %v81, 0.0
    %v170 = vadd.f32 %v82, 0.0
    %v171 = vadd.f32 %v83, 0.0
    %v172 = vadd.f32 %v84, 0.0
    %vm173 = vcmp.ge.f32.partialorder %v169, 0.0
    %vm174 = vcmp.ge.f32.partialorder %v170, 0.0
    %vm175 = vcmp.ge.f32.partialorder %v171, 0.0
    %vm176 = vcmp.ge.f32.partialorder %v172, 0.0
    %vm177 = vmand %vm116, %vm173
    %vm178 = vmand %vm117, %vm174
    %vm179 = vmand %vm118, %vm175
    %vm180 = vmand %vm119, %vm176
    %vm181 = vcmp.lt.f32.partialorder %v169, 16.0
    %vm182 = vcmp.lt.f32.partialorder %v170, 16.0
    %vm183 = vcmp.lt.f32.partialorder %v171, 16.0
    %vm184 = vcmp.lt.f32.partialorder %v172, 16.0
    %vm185 = vmand %vm177, %vm181
    %vm186 = vmand %vm178, %vm182
    %vm187 = vmand %vm179, %vm183
    %vm188 = vmand %vm180, %vm184
    %v189 = vsel %vm185, 1, 0
    %v190 = vsel %vm186, 1, 0
    %v191 = vsel %vm187, 1, 0
    %v192 = vsel %vm188, 1, 0
    %vm193 = vcmp.eq.s32.totalorder %v189, 1
    %vm194 = vcmp.eq.s32.totalorder %v190, 1
    %vm195 = vcmp.eq.s32.totalorder %v191, 1
    %vm196 = vcmp.eq.s32.totalorder %v192, 1
    %v197 = vsel %vm193, %v168, 0.0
    %v198 = vsel %vm194, %v167, 0.0
    %v199 = vsel %vm195, %v166, 0.0
    %v200 = vsel %vm196, %v165, 0.0
    %v205 = vrot.slane %v197, 4
    %v206 = vrot.slane %v198, 4
    %v207 = vrot.slane %v199, 4
    %v208 = vrot.slane %v200, 4
    %213 = vst [vmem:[#allocation3] sm:$0xf0] %v205
    %214 = vst [vmem:[#allocation3 + $0x8] sm:$0xf0] %v206
    %215 = vst [vmem:[#allocation3 + $0x10] sm:$0xf0] %v207
    %216 = vst [vmem:[#allocation3 + $0x18] sm:$0xf0] %v208
    %217 = vrot.lane.b32.xlu0 %v34, 15
    %v218 = vpop.permute.xlu0 %217
    %219 = vrot.lane.b32.xlu0 %v87, 15
    %v220 = vpop.permute.xlu0 %219
    %221 = vrot.lane.b32.xlu0 %v35, 15
    %v222 = vpop.permute.xlu0 %221
    %223 = vrot.lane.b32.xlu0 %v88, 15
    %v224 = vpop.permute.xlu0 %223
    %vm225 = vcmp.lt.s32.totalorder %v37, 15
    %v226 = vsel %vm225, %v222, %v224
    %v227 = vsel %vm225, %v220, %v222
    %v228 = vsel %vm225, %v218, %v220
    %v229 = vsel %vm225, %v224, %v218
    %v230 = vadd.f32 %v81, 1.0
    %v231 = vadd.f32 %v82, 1.0
    %v232 = vadd.f32 %v83, 1.0
    %v233 = vadd.f32 %v84, 1.0
    %vm234 = vcmp.ge.f32.partialorder %v230, 0.0
    %vm235 = vcmp.ge.f32.partialorder %v231, 0.0
    %vm236 = vcmp.ge.f32.partialorder %v232, 0.0
    %vm237 = vcmp.ge.f32.partialorder %v233, 0.0
    %vm238 = vmand %vm116, %vm234
    %vm239 = vmand %vm117, %vm235
    %vm240 = vmand %vm118, %vm236
    %vm241 = vmand %vm119, %vm237
    %vm242 = vcmp.lt.f32.partialorder %v230, 16.0
    %vm243 = vcmp.lt.f32.partialorder %v231, 16.0
    %vm244 = vcmp.lt.f32.partialorder %v232, 16.0
    %vm245 = vcmp.lt.f32.partialorder %v233, 16.0
    %vm246 = vmand %vm238, %vm242
    %vm247 = vmand %vm239, %vm243
    %vm248 = vmand %vm240, %vm244
    %vm249 = vmand %vm241, %vm245
    %v250 = vsel %vm246, 1, 0
    %v251 = vsel %vm247, 1, 0
    %v252 = vsel %vm248, 1, 0
    %v253 = vsel %vm249, 1, 0
    %vm254 = vcmp.eq.s32.totalorder %v250, 1
    %vm255 = vcmp.eq.s32.totalorder %v251, 1
    %vm256 = vcmp.eq.s32.totalorder %v252, 1
    %vm257 = vcmp.eq.s32.totalorder %v253, 1
    %v258 = vsel %vm254, %v229, 0.0
    %v259 = vsel %vm255, %v228, 0.0
    %v260 = vsel %vm256, %v227, 0.0
    %v261 = vsel %vm257, %v226, 0.0
    %262 = vst [vmem:[#allocation3 + $0x20] sm:$0xf] %v258
    %263 = vst [vmem:[#allocation3 + $0x28] sm:$0xf] %v259
    %264 = vst [vmem:[#allocation3 + $0x30] sm:$0xf] %v260
    %265 = vst [vmem:[#allocation3 + $0x38] sm:$0xf] %v261
    %266 = vrot.lane.b32.xlu0 %v34, 1
    %v267 = vpop.permute.xlu0 %266
    %268 = vrot.lane.b32.xlu0 %v87, 1
    %v269 = vpop.permute.xlu0 %268
    %270 = vrot.lane.b32.xlu0 %v35, 1
    %v271 = vpop.permute.xlu0 %270
    %272 = vrot.lane.b32.xlu0 %v88, 1
    %v273 = vpop.permute.xlu0 %272
    %vm274 = vcmp.lt.s32.totalorder %v37, 1
    %v275 = vsel %vm274, %v271, %v273
    %v276 = vsel %vm274, %v269, %v271
    %v277 = vsel %vm274, %v267, %v269
    %v278 = vsel %vm274, %v273, %v267
    %v279 = vadd.f32 %v73, 0.0
    %v280 = vadd.f32 %v74, 0.0
    %v281 = vadd.f32 %v75, 0.0
    %v282 = vadd.f32 %v76, 0.0
    %vm283 = vcmp.ge.f32.partialorder %v279, 0.0
    %vm284 = vcmp.ge.f32.partialorder %v280, 0.0
    %vm285 = vcmp.ge.f32.partialorder %v281, 0.0
    %vm286 = vcmp.ge.f32.partialorder %v282, 0.0
    %vm287 = vcmp.lt.f32.partialorder %v279, 16.0
    %vm288 = vcmp.lt.f32.partialorder %v280, 16.0
    %vm289 = vcmp.lt.f32.partialorder %v281, 16.0
    %vm290 = vcmp.lt.f32.partialorder %v282, 16.0
    %vm291 = vmand %vm283, %vm287
    %vm292 = vmand %vm284, %vm288
    %vm293 = vmand %vm285, %vm289
    %vm294 = vmand %vm286, %vm290
    %vm295 = vmand %vm291, %vm124
    %vm296 = vmand %vm292, %vm125
    %vm297 = vmand %vm293, %vm126
    %vm298 = vmand %vm294, %vm127
    %vm299 = vmand %vm295, %vm132
    %vm300 = vmand %vm296, %vm133
    %vm301 = vmand %vm297, %vm134
    %vm302 = vmand %vm298, %vm135
    %v303 = vsel %vm299, 1, 0
    %v304 = vsel %vm300, 1, 0
    %v305 = vsel %vm301, 1, 0
    %v306 = vsel %vm302, 1, 0
    %vm307 = vcmp.eq.s32.totalorder %v303, 1
    %vm308 = vcmp.eq.s32.totalorder %v304, 1
    %vm309 = vcmp.eq.s32.totalorder %v305, 1
    %vm310 = vcmp.eq.s32.totalorder %v306, 1
    %v311 = vsel %vm307, %v278, 0.0
    %v312 = vsel %vm308, %v277, 0.0
    %v313 = vsel %vm309, %v276, 0.0
    %v314 = vsel %vm310, %v275, 0.0
    %v319 = vrot.slane %v311, 4
    %v320 = vrot.slane %v312, 4
    %v321 = vrot.slane %v313, 4
    %v322 = vrot.slane %v314, 4
    %327 = vst [vmem:[#allocation3 + $0x20] sm:$0xf0] %v319
    %328 = vst [vmem:[#allocation3 + $0x28] sm:$0xf0] %v320
    %329 = vst [vmem:[#allocation3 + $0x30] sm:$0xf0] %v321
    %330 = vst [vmem:[#allocation3 + $0x38] sm:$0xf0] %v322
    %331 = vst [vmem:[#allocation3 + $0x40] sm:$0xf] %v34
    %332 = vst [vmem:[#allocation3 + $0x48] sm:$0xf] %v87
    %333 = vst [vmem:[#allocation3 + $0x50] sm:$0xf] %v35
    %334 = vst [vmem:[#allocation3 + $0x58] sm:$0xf] %v88
    %335 = vrot.lane.b32.xlu0 %v34, 127
    %v336 = vpop.permute.xlu0 %335
    %337 = vrot.lane.b32.xlu0 %v87, 127
    %v338 = vpop.permute.xlu0 %337
    %339 = vrot.lane.b32.xlu0 %v35, 127
    %v340 = vpop.permute.xlu0 %339
    %341 = vrot.lane.b32.xlu0 %v88, 127
    %v342 = vpop.permute.xlu0 %341
    %vm343 = vcmp.lt.s32.totalorder %v37, 127
    %v344 = vsel %vm343, %v340, %v342
    %v345 = vsel %vm343, %v338, %v340
    %v346 = vsel %vm343, %v336, %v338
    %v347 = vsel %vm343, %v342, %v336
    %vm348 = vmand %vm291, %vm234
    %vm349 = vmand %vm292, %vm235
    %vm350 = vmand %vm293, %vm236
    %vm351 = vmand %vm294, %vm237
    %vm352 = vmand %vm348, %vm242
    %vm353 = vmand %vm349, %vm243
    %vm354 = vmand %vm350, %vm244
    %vm355 = vmand %vm351, %vm245
    %v356 = vsel %vm352, 1, 0
    %v357 = vsel %vm353, 1, 0
    %v358 = vsel %vm354, 1, 0
    %v359 = vsel %vm355, 1, 0
    %vm360 = vcmp.eq.s32.totalorder %v356, 1
    %vm361 = vcmp.eq.s32.totalorder %v357, 1
    %vm362 = vcmp.eq.s32.totalorder %v358, 1
    %vm363 = vcmp.eq.s32.totalorder %v359, 1
    %v364 = vsel %vm360, %v346, 0.0
    %v365 = vsel %vm361, %v345, 0.0
    %v366 = vsel %vm362, %v344, 0.0
    %v367 = vsel %vm363, %v347, 0.0
    %v372 = vrot.slane %v364, 4
    %v373 = vrot.slane %v365, 4
    %v374 = vrot.slane %v366, 4
    %v375 = vrot.slane %v367, 4
    %380 = vst [vmem:[#allocation3 + $0x40] sm:$0xf0] %v372
    %381 = vst [vmem:[#allocation3 + $0x48] sm:$0xf0] %v373
    %382 = vst [vmem:[#allocation3 + $0x50] sm:$0xf0] %v374
    %383 = vst [vmem:[#allocation3 + $0x58] sm:$0xf0] %v375
    %384 = vrot.lane.b32.xlu0 %v34, 113
    %v385 = vpop.permute.xlu0 %384
    %386 = vrot.lane.b32.xlu0 %v87, 113
    %v387 = vpop.permute.xlu0 %386
    %388 = vrot.lane.b32.xlu0 %v35, 113
    %v389 = vpop.permute.xlu0 %388
    %390 = vrot.lane.b32.xlu0 %v88, 113
    %v391 = vpop.permute.xlu0 %390
    %vm392 = vcmp.lt.s32.totalorder %v37, 113
    %v393 = vsel %vm392, %v389, %v391
    %v394 = vsel %vm392, %v387, %v389
    %v395 = vsel %vm392, %v385, %v387
    %v396 = vsel %vm392, %v391, %v385
    %v397 = vadd.f32 %v73, 1.0
    %v398 = vadd.f32 %v74, 1.0
    %v399 = vadd.f32 %v75, 1.0
    %v400 = vadd.f32 %v76, 1.0
    %vm401 = vcmp.ge.f32.partialorder %v397, 0.0
    %vm402 = vcmp.ge.f32.partialorder %v398, 0.0
    %vm403 = vcmp.ge.f32.partialorder %v399, 0.0
    %vm404 = vcmp.ge.f32.partialorder %v400, 0.0
    %vm405 = vcmp.lt.f32.partialorder %v397, 16.0
    %vm406 = vcmp.lt.f32.partialorder %v398, 16.0
    %vm407 = vcmp.lt.f32.partialorder %v399, 16.0
    %vm408 = vcmp.lt.f32.partialorder %v400, 16.0
    %vm409 = vmand %vm401, %vm405
    %vm410 = vmand %vm402, %vm406
    %vm411 = vmand %vm403, %vm407
    %vm412 = vmand %vm404, %vm408
    %vm413 = vmand %vm409, %vm124
    %vm414 = vmand %vm410, %vm125
    %vm415 = vmand %vm411, %vm126
    %vm416 = vmand %vm412, %vm127
    %vm417 = vmand %vm413, %vm132
    %vm418 = vmand %vm414, %vm133
    %vm419 = vmand %vm415, %vm134
    %vm420 = vmand %vm416, %vm135
    %v421 = vsel %vm417, 1, 0
    %v422 = vsel %vm418, 1, 0
    %v423 = vsel %vm419, 1, 0
    %v424 = vsel %vm420, 1, 0
    %vm425 = vcmp.eq.s32.totalorder %v421, 1
    %vm426 = vcmp.eq.s32.totalorder %v422, 1
    %vm427 = vcmp.eq.s32.totalorder %v423, 1
    %vm428 = vcmp.eq.s32.totalorder %v424, 1
    %v429 = vsel %vm425, %v395, 0.0
    %v430 = vsel %vm426, %v394, 0.0
    %v431 = vsel %vm427, %v393, 0.0
    %v432 = vsel %vm428, %v396, 0.0
    %433 = vst [vmem:[#allocation3 + $0x60] sm:$0xf] %v429
    %434 = vst [vmem:[#allocation3 + $0x68] sm:$0xf] %v430
    %435 = vst [vmem:[#allocation3 + $0x70] sm:$0xf] %v431
    %436 = vst [vmem:[#allocation3 + $0x78] sm:$0xf] %v432
    %437 = vrot.lane.b32.xlu0 %v34, 112
    %v438 = vpop.permute.xlu0 %437
    %439 = vrot.lane.b32.xlu0 %v87, 112
    %v440 = vpop.permute.xlu0 %439
    %441 = vrot.lane.b32.xlu0 %v35, 112
    %v442 = vpop.permute.xlu0 %441
    %443 = vrot.lane.b32.xlu0 %v88, 112
    %v444 = vpop.permute.xlu0 %443
    %vm445 = vcmp.lt.s32.totalorder %v37, 112
    %v446 = vsel %vm445, %v442, %v444
    %v447 = vsel %vm445, %v440, %v442
    %v448 = vsel %vm445, %v438, %v440
    %v449 = vsel %vm445, %v444, %v438
    %vm450 = vmand %vm409, %vm173
    %vm451 = vmand %vm410, %vm174
    %vm452 = vmand %vm411, %vm175
    %vm453 = vmand %vm412, %vm176
    %vm454 = vmand %vm450, %vm181
    %vm455 = vmand %vm451, %vm182
    %vm456 = vmand %vm452, %vm183
    %vm457 = vmand %vm453, %vm184
    %v458 = vsel %vm454, 1, 0
    %v459 = vsel %vm455, 1, 0
    %v460 = vsel %vm456, 1, 0
    %v461 = vsel %vm457, 1, 0
    %vm462 = vcmp.eq.s32.totalorder %v458, 1
    %vm463 = vcmp.eq.s32.totalorder %v459, 1
    %vm464 = vcmp.eq.s32.totalorder %v460, 1
    %vm465 = vcmp.eq.s32.totalorder %v461, 1
    %v466 = vsel %vm462, %v448, 0.0
    %v467 = vsel %vm463, %v447, 0.0
    %v468 = vsel %vm464, %v446, 0.0
    %v469 = vsel %vm465, %v449, 0.0
    %v474 = vrot.slane %v466, 4
    %v475 = vrot.slane %v467, 4
    %v476 = vrot.slane %v468, 4
    %v477 = vrot.slane %v469, 4
    %482 = vst [vmem:[#allocation3 + $0x60] sm:$0xf0] %v474
    %483 = vst [vmem:[#allocation3 + $0x68] sm:$0xf0] %v475
    %484 = vst [vmem:[#allocation3 + $0x70] sm:$0xf0] %v476
    %485 = vst [vmem:[#allocation3 + $0x78] sm:$0xf0] %v477
    %486 = vrot.lane.b32.xlu0 %v34, 111
    %v487 = vpop.permute.xlu0 %486
    %488 = vrot.lane.b32.xlu0 %v87, 111
    %v489 = vpop.permute.xlu0 %488
    %490 = vrot.lane.b32.xlu0 %v35, 111
    %v491 = vpop.permute.xlu0 %490
    %492 = vrot.lane.b32.xlu0 %v88, 111
    %v493 = vpop.permute.xlu0 %492
    %vm494 = vcmp.lt.s32.totalorder %v37, 111
    %v495 = vsel %vm494, %v491, %v493
    %v496 = vsel %vm494, %v489, %v491
    %v497 = vsel %vm494, %v487, %v489
    %v498 = vsel %vm494, %v493, %v487
    %vm499 = vmand %vm409, %vm234
    %vm500 = vmand %vm410, %vm235
    %vm501 = vmand %vm411, %vm236
    %vm502 = vmand %vm412, %vm237
    %vm503 = vmand %vm499, %vm242
    %vm504 = vmand %vm500, %vm243
    %vm505 = vmand %vm501, %vm244
    %vm506 = vmand %vm502, %vm245
    %v507 = vsel %vm503, 1, 0
    %v508 = vsel %vm504, 1, 0
    %v509 = vsel %vm505, 1, 0
    %v510 = vsel %vm506, 1, 0
    %vm511 = vcmp.eq.s32.totalorder %v507, 1
    %vm512 = vcmp.eq.s32.totalorder %v508, 1
    %vm513 = vcmp.eq.s32.totalorder %v509, 1
    %vm514 = vcmp.eq.s32.totalorder %v510, 1
    %v515 = vsel %vm511, %v497, 0.0
    %v516 = vsel %vm512, %v496, 0.0
    %v517 = vsel %vm513, %v495, 0.0
    %v518 = vsel %vm514, %v498, 0.0
    %519 = vst [vmem:[#allocation3 + $0x80] sm:$0xf] %v515
    %520 = vst [vmem:[#allocation3 + $0x88] sm:$0xf] %v516
    %521 = vst [vmem:[#allocation3 + $0x90] sm:$0xf] %v517
    %522 = vst [vmem:[#allocation3 + $0x98] sm:$0xf] %v518
    %v523 = vld [vmem:[%s1] sm:$0xff]
    %v524 = vld [vmem:[#allocation3] sm:$0xff]
    %v525 = vld [vmem:[#allocation3 + $0x8] sm:$0xff]
    %v526 = vld [vmem:[#allocation3 + $0x10] sm:$0xff]
    %v527 = vld [vmem:[#allocation3 + $0x18] sm:$0xff]
    %v528 = vld [vmem:[#allocation3 + $0x20] sm:$0xff]
    %v529 = vld [vmem:[#allocation3 + $0x28] sm:$0xff]
    %v530 = vld [vmem:[#allocation3 + $0x30] sm:$0xff]
    %v531 = vld [vmem:[#allocation3 + $0x38] sm:$0xff]
    %v532 = vld [vmem:[#allocation3 + $0x40] sm:$0xff]
    %v533 = vld [vmem:[#allocation3 + $0x48] sm:$0xff]
    %v534 = vld [vmem:[#allocation3 + $0x50] sm:$0xff]
    %v535 = vld [vmem:[#allocation3 + $0x58] sm:$0xff]
    %v536 = vld [vmem:[#allocation3 + $0x60] sm:$0xff]
    %v537 = vld [vmem:[#allocation3 + $0x68] sm:$0xff]
    %v538 = vld [vmem:[#allocation3 + $0x70] sm:$0xff]
    %v539 = vld [vmem:[#allocation3 + $0x78] sm:$0xff]
    %v540 = vld [vmem:[#allocation3 + $0x80] sm:$0xf]
    %v541 = vld [vmem:[#allocation3 + $0x88] sm:$0xf]
    %v542 = vld [vmem:[#allocation3 + $0x90] sm:$0xf]
    %v543 = vld [vmem:[#allocation3 + $0x98] sm:$0xf]
    %v544 = vld [vmem:[%s2] sm:$0xff]
    %546 = vset.pattern.permute.xlu0 0
    %547 = vperm.xlu0 %546, %v544
    %v548 = vpop.permute.xlu0 %547
    %vm550 = vcmask 293888
    %v552 = vsel %vm550, %v523, 0
    %vm554 = vcmask 1043456
    %v556 = vsel %vm554, %v540, 0
    %v559 = vsel %vm554, %v541, 0
    %v562 = vsel %vm554, %v542, 0
    %v565 = vsel %vm554, %v543, 0
    %567 = vmatprep.subr.mxu0 %v525
    %568 = vmatpush1.msra.mxu0 %v524
    %569 = vmatprep.subr.mxu0 %v529
    %570 = vmatpush1.msra.mxu0 %v528
    %571 = vmatprep.subr.mxu0 %v533
    %572 = vmatpush1.msra.mxu0 %v532
    %573 = vmatprep.subr.mxu0 %v537
    %574 = vmatpush1.msra.mxu0 %v536
    %575 = vmatprep.subr.mxu0 %v559
    %576 = vmatpush1.msra.mxu0 %v556
    %577 = vmatprep.subr.mxu0 0.0
    %578 = vmatpush1.msra.mxu0 0.0
    %579 = vmatprep.subr.mxu0 0.0
    %580 = vmatpush1.msra.mxu0 0.0
    %581 = vmatprep.subr.mxu0 0.0
    %582 = vmatpush1.msra.mxu0 0.0
    %583 = vmatprep.subr.mxu0 0.0
    %584 = vmatpush1.msra.mxu0 0.0
    %585 = vmatprep.subr.mxu0 0.0
    %586 = vmatpush1.msra.mxu0 0.0
    %587 = vmatprep.subr.mxu0 0.0
    %588 = vmatpush1.msra.mxu0 0.0
    %589 = vmatprep.subr.mxu0 0.0
    %590 = vmatpush1.msra.mxu0 0.0
    %591 = vmatprep.subr.mxu0 0.0
    %592 = vmatpush1.msra.mxu0 0.0
    %593 = vmatprep.subr.mxu0 0.0
    %594 = vmatpush1.msra.mxu0 0.0
    %595 = vmatprep.subr.mxu0 0.0
    %596 = vmatpush1.msra.mxu0 0.0
    %597 = vmatprep.subr.mxu0 0.0
    %598 = vmatpush1.msra.mxu0 0.0
    %599 = vmatprep.subr.mxu0 0.0
    %600 = vmatpush1.msra.mxu0 0.0
    %601 = vmatprep.subr.mxu0 0.0
    %602 = vmatpush1.msra.mxu0 0.0
    %603 = vmatprep.subr.mxu0 0.0
    %604 = vmatpush1.msra.mxu0 0.0
    %605 = vmatprep.subr.mxu0 0.0
    %606 = vmatpush1.msra.mxu0 0.0
    %607 = vmatprep.subr.mxu0 0.0
    %608 = vmatpush1.msra.mxu0 0.0
    %609 = vmatprep.subr.mxu0 0.0
    %610 = vmatpush1.msra.mxu0 0.0
    %611 = vmatprep.subr.mxu0 0.0
    %612 = vmatpush1.msra.mxu0 0.0
    %613 = vmatprep.subr.mxu0 0.0
    %614 = vmatpush1.msra.mxu0 0.0
    %615 = vmatprep.subr.mxu0 0.0
    %616 = vmatpush1.msra.mxu0 0.0
    %617 = vmatprep.subr.mxu0 0.0
    %618 = vmatpush1.msra.mxu0 0.0
    %619 = vmatprep.subr.mxu0 0.0
    %620 = vmatpush1.msra.mxu0 0.0
    %621 = vmatprep.subr.mxu0 0.0
    %622 = vmatpush1.msra.mxu0 0.0
    %623 = vmatprep.subr.mxu0 0.0
    %624 = vmatpush1.msra.mxu0 0.0
    %625 = vmatprep.subr.mxu0 0.0
    %626 = vmatpush1.msra.mxu0 0.0
    %627 = vmatprep.subr.mxu0 0.0
    %628 = vmatpush1.msra.mxu0 0.0
    %629 = vmatprep.subr.mxu0 0.0
    %630 = vmatpush1.msra.mxu0 0.0
    %631 = vmatprep.mubr.f32.mxu0 0.0
    %632 = vmatmul.mubr.f32.gmra.mrb[0].mxu0 %v552
    %v633 = vpop.f32.mrb[0].mxu0
    %v634 = vadd.f32 %v548, %v633
    %v635 = vpop.f32.mrb[0].mxu0
    %v636 = vadd.f32 %v548, %v635
    %637 = vdwg.mxu0
    %638 = vmatprep.subr.mxu0 %v527
    %639 = vmatpush1.msra.mxu0 %v526
    %640 = vmatprep.subr.mxu0 %v531
    %641 = vmatpush1.msra.mxu0 %v530
    %642 = vmatprep.subr.mxu0 %v535
    %643 = vmatpush1.msra.mxu0 %v534
    %644 = vmatprep.subr.mxu0 %v539
    %645 = vmatpush1.msra.mxu0 %v538
    %646 = vmatprep.subr.mxu0 %v565
    %647 = vmatpush1.msra.mxu0 %v562
    %648 = vmatprep.subr.mxu0 0.0
    %649 = vmatpush1.msra.mxu0 0.0
    %650 = vmatprep.subr.mxu0 0.0
    %651 = vmatpush1.msra.mxu0 0.0
    %652 = vmatprep.subr.mxu0 0.0
    %653 = vmatpush1.msra.mxu0 0.0
    %654 = vmatprep.subr.mxu0 0.0
    %655 = vmatpush1.msra.mxu0 0.0
    %656 = vmatprep.subr.mxu0 0.0
    %657 = vmatpush1.msra.mxu0 0.0
    %658 = vmatprep.subr.mxu0 0.0
    %659 = vmatpush1.msra.mxu0 0.0
    %660 = vmatprep.subr.mxu0 0.0
    %661 = vmatpush1.msra.mxu0 0.0
    %662 = vmatprep.subr.mxu0 0.0
    %663 = vmatpush1.msra.mxu0 0.0
    %664 = vmatprep.subr.mxu0 0.0
    %665 = vmatpush1.msra.mxu0 0.0
    %666 = vmatprep.subr.mxu0 0.0
    %667 = vmatpush1.msra.mxu0 0.0
    %668 = vmatprep.subr.mxu0 0.0
    %669 = vmatpush1.msra.mxu0 0.0
    %670 = vmatprep.subr.mxu0 0.0
    %671 = vmatpush1.msra.mxu0 0.0
    %672 = vmatprep.subr.mxu0 0.0
    %673 = vmatpush1.msra.mxu0 0.0
    %674 = vmatprep.subr.mxu0 0.0
    %675 = vmatpush1.msra.mxu0 0.0
    %676 = vmatprep.subr.mxu0 0.0
    %677 = vmatpush1.msra.mxu0 0.0
    %678 = vmatprep.subr.mxu0 0.0
    %679 = vmatpush1.msra.mxu0 0.0
    %680 = vmatprep.subr.mxu0 0.0
    %681 = vmatpush1.msra.mxu0 0.0
    %682 = vmatprep.subr.mxu0 0.0
    %683 = vmatpush1.msra.mxu0 0.0
    %684 = vmatprep.subr.mxu0 0.0
    %685 = vmatpush1.msra.mxu0 0.0
    %686 = vmatprep.subr.mxu0 0.0
    %687 = vmatpush1.msra.mxu0 0.0
    %688 = vmatprep.subr.mxu0 0.0
    %689 = vmatpush1.msra.mxu0 0.0
    %690 = vmatprep.subr.mxu0 0.0
    %691 = vmatpush1.msra.mxu0 0.0
    %692 = vmatprep.subr.mxu0 0.0
    %693 = vmatpush1.msra.mxu0 0.0
    %694 = vmatprep.subr.mxu0 0.0
    %695 = vmatpush1.msra.mxu0 0.0
    %696 = vmatprep.subr.mxu0 0.0
    %697 = vmatpush1.msra.mxu0 0.0
    %698 = vmatprep.subr.mxu0 0.0
    %699 = vmatpush1.msra.mxu0 0.0
    %700 = vmatprep.subr.mxu0 0.0
    %701 = vmatpush1.msra.mxu0 0.0
    %702 = vmatprep.mubr.f32.mxu0 0.0
    %703 = vmatmul.mubr.f32.gmra.mrb[0].mxu0 %v552
    %v704 = vpop.f32.mrb[0].mxu0
    %v705 = vadd.f32 %v548, %v704
    %v706 = vpop.f32.mrb[0].mxu0
    %v707 = vadd.f32 %v548, %v706
    %708 = vdwg.mxu0
    %v709 = vmax.f32 %v634, 0.0
    %v710 = vmax.f32 %v636, 0.0
    %v711 = vmax.f32 %v705, 0.0
    %v712 = vmax.f32 %v707, 0.0
    %713 = vst [vmem:[#allocation7] sm:$0xff] %v709
    %714 = vst [vmem:[#allocation7 + $0x8] sm:$0xff] %v710
    %s715 = scalar_lea.vmem [#allocation7], 16
    %716 = vst [vmem:[%s715] sm:$0xff] %v711
    %717 = vst [vmem:[%s715 + $0x8] sm:$0xff] %v712
    // Predicated region
    $region18: #{tpu_custom_call.1} parent=1 // pred_check
      _
    $region19: #{tpu_custom_call.1} parent=1 // pred_check_branch
      %719 = sbr.rel (0) target = $region21
    $region20: #{tpu_custom_call.1} parent=1 // pred_region
      %s721 = ssub.s32 512, 512
      %722 = vsyncadd [#allocation6], %s721
      %s723 = sshll.u32 [#allocation7], 4
      %s724 = int_to_ptr.vmem [resolvable:$true] %s723
      %729 = dma.vmem_to_hbm [thread:$0]  %s724, 512, %s3, [#allocation6], 256, 256, 16
    $region21: #{tpu_custom_call.1} parent=1 // pred_fallthru
      _
    // Predicated region
    $region22: #{tpu_custom_call.1} parent=1 // pred_check
      _
    $region23: #{tpu_custom_call.1} parent=1 // pred_check_branch
      %731 = sbr.rel (0) target = $region25
    $region24: #{tpu_custom_call.1} parent=1 // pred_region
      %732 = dma.done [#allocation6], 512
    $region25: #{tpu_custom_call.1} parent=1 // pred_fallthru
      _
    %733 = vsyncpa [#allocation5], 1
    %734 = vsyncpa [#allocation6], 1

</llo_original>
